<compile_context>
chip_gen: v5e
topology: v5e:2x2
jax: 0.10.0
libtpu: 0.0.40
codegen_flags: <defaults>
</compile_context>

<pallas_src>
import jax
import jax.numpy as jnp
from jax.experimental import pallas as pl
from jax.experimental.pallas import tpu as pltpu

SCALE = 1.0  # WScaleLayer hard-codes self.scale = 1.0 -> folded into a pure add.

_TARGET_BLOCK_BYTES = 2 * 1024 * 1024  # ~2 MiB per x block (x4 with dbl-buffered in/out)


def _add_row_bias_kernel(x_ref, b_ref, o_ref):
    # x_ref: (tm, tl); b_ref: (tm, 1) per-row bias, broadcast across lanes.
    o_ref[...] = x_ref[...] + b_ref[...]


def _add_col_bias_kernel(x_ref, b_ref, o_ref):
    # x_ref: (tm, C); b_ref: (1, C) per-channel bias, broadcast across rows.
    o_ref[...] = x_ref[...] + b_ref[...]


def _pick_tiles(M, L, itemsize):
    """Pick (tm, tl): lane tile a multiple of 128 (or full L), row tile a
    multiple of 8 (or full M), targeting ~_TARGET_BLOCK_BYTES per block."""
    tl = L if L <= 4096 else 2048
    target_rows = max(1, _TARGET_BLOCK_BYTES // (tl * itemsize))
    if target_rows >= M:
        tm = M
    else:
        tm = max(8, (target_rows // 8) * 8)
    return tm, tl


def _wscale_nchw(x, bias):
    """4-D NCHW path: operate on the native layout, H*W on the lane axis."""
    N, C, H, W = x.shape
    HW = H * W
    x2d = x.reshape(N * C, HW)  # free reshape (NCHW is contiguous in H, W)
    # Tiny (N*C, 1) per-row bias column (row -> channel = row % C).
    bias_col = jnp.broadcast_to(
        bias.astype(x.dtype)[None, :], (N, C)
    ).reshape(N * C, 1)

    M, L = x2d.shape
    tm, tl = _pick_tiles(M, L, x2d.dtype.itemsize)

    y2d = pl.pallas_call(
        _add_row_bias_kernel,
        out_shape=jax.ShapeDtypeStruct((M, L), x2d.dtype),
        grid_spec=pltpu.PrefetchScalarGridSpec(
            num_scalar_prefetch=0,
            grid=(pl.cdiv(M, tm), pl.cdiv(L, tl)),
            in_specs=[
                pl.BlockSpec((tm, tl), lambda i, j: (i, j)),
                pl.BlockSpec((tm, 1), lambda i, j: (i, 0)),
            ],
            out_specs=pl.BlockSpec((tm, tl), lambda i, j: (i, j)),
        ),
        compiler_params=pltpu.CompilerParams(
            dimension_semantics=("parallel", "parallel"),
        ),
    )(x2d, bias_col)
    return y2d.reshape(N, C, H, W)


def _wscale_2d(x, bias):
    """2-D (N, C) path: channels already on the lane axis; bias is a (1, C) row."""
    M, C = x.shape
    bias_row = bias.astype(x.dtype).reshape(1, C)

    target_rows = max(8, _TARGET_BLOCK_BYTES // max(1, C * x.dtype.itemsize))
    tm = M if target_rows >= M else (target_rows // 8) * 8

    return pl.pallas_call(
        _add_col_bias_kernel,
        out_shape=jax.ShapeDtypeStruct((M, C), x.dtype),
        grid_spec=pltpu.PrefetchScalarGridSpec(
            num_scalar_prefetch=0,
            grid=(pl.cdiv(M, tm),),
            in_specs=[
                pl.BlockSpec((tm, C), lambda i: (i, 0)),
                pl.BlockSpec((1, C), lambda i: (0, 0)),
            ],
            out_specs=pl.BlockSpec((tm, C), lambda i: (i, 0)),
        ),
        compiler_params=pltpu.CompilerParams(
            dimension_semantics=("parallel",),
        ),
    )(x, bias_row)


def wscale_layer(x, bias, *, min_pallas_elements=1 << 14):
    """Forward pass of WScaleLayer.

    x: (N, C, H, W) NCHW or (N, C); bias: (C,).
    Inputs smaller than `min_pallas_elements` use a plain XLA add (kernel
    launch overhead dominates for tiny tensors).
    """
    if x.ndim == 4:
        if x.size < min_pallas_elements:
            return x + bias.astype(x.dtype).reshape(1, -1, 1, 1)
        return _wscale_nchw(x, bias)
    if x.ndim == 2:
        if x.size < min_pallas_elements:
            return x + bias.astype(x.dtype).reshape(1, -1)
        return _wscale_2d(x, bias)
    raise ValueError(
        "The input tensor should be with shape [batch_size, channel, height, "
        f"width], or [batch_size, channel]!\nBut {x.shape} is received!"
    )


if __name__ == "__main__":
    key = jax.random.PRNGKey(0)
    k_x4, k_x2, k_b = jax.random.split(key, 3)

    N, C, H, W = 2, 4, 16, 16
    x4 = jax.random.normal(k_x4, (N, C, H, W), dtype=jnp.float32)
    x2 = jax.random.normal(k_x2, (N, C), dtype=jnp.float32)
    # Module __init__ creates bias = zeros(out_channels); use non-zero values
    # here so the broadcast-add is actually exercised.
    bias = jax.random.normal(k_b, (C,), dtype=jnp.float32) * 0.1

    # Force the Pallas kernels even at these small test shapes.
    y4 = jax.block_until_ready(wscale_layer(x4, bias, min_pallas_elements=0))
    y2 = jax.block_until_ready(wscale_layer(x2, bias, min_pallas_elements=0))
    # Also exercise the default dispatch (XLA fallback below the size threshold).
    y4_d = jax.block_until_ready(wscale_layer(x4, bias))
    y2_d = jax.block_until_ready(wscale_layer(x2, bias))

    ref4 = x4 * SCALE + bias.reshape(1, C, 1, 1)
    ref2 = x2 * SCALE + bias.reshape(1, C)

    assert y4.shape == (N, C, H, W) and y4.dtype == jnp.float32
    assert y2.shape == (N, C) and y2.dtype == jnp.float32
    assert jnp.allclose(y4, ref4, atol=1e-6), "4D Pallas mismatch"
    assert jnp.allclose(y2, ref2, atol=1e-6), "2D Pallas mismatch"
    assert jnp.allclose(y4_d, ref4, atol=1e-6), "4D fallback mismatch"
    assert jnp.allclose(y2_d, ref2, atol=1e-6), "2D fallback mismatch"

    print("KERNEL_OK")
</pallas_src>

<mosaic_0001>
module attributes {stable_mosaic.version = 11 : i64} {
  func.func @_add_row_bias_kernel(%arg0: i32, %arg1: i32, %arg2: memref<8x256xf32, #tpu.memory_space<vmem>>, %arg3: memref<8x1xf32, #tpu.memory_space<vmem>>, %arg4: memref<8x256xf32, #tpu.memory_space<vmem>>) attributes {dimension_semantics = [#tpu.dimension_semantics<parallel>, #tpu.dimension_semantics<parallel>], iteration_bounds = array<i64: 1, 1>, scalar_prefetch = 0 : i64, scratch_operands = 0 : i64, tpu.core_type = #tpu.core_type<tc>, window_params = [{transform_indices = @transform_0, window_bounds = array<i64: 8, 256>}, {transform_indices = @transform_1, window_bounds = array<i64: 8, 1>}, {transform_indices = @transform_2, window_bounds = array<i64: 8, 256>}]} {
    %c0 = arith.constant 0 : index
    %c0_0 = arith.constant 0 : index
    %0 = vector.load %arg2[%c0, %c0_0] : memref<8x256xf32, #tpu.memory_space<vmem>>, vector<8x256xf32>
    %c0_1 = arith.constant 0 : index
    %c0_2 = arith.constant 0 : index
    %1 = vector.load %arg3[%c0_1, %c0_2] : memref<8x1xf32, #tpu.memory_space<vmem>>, vector<8x1xf32>
    %2 = vector.broadcast %1 : vector<8x1xf32> to vector<8x256xf32>
    %3 = arith.addf %0, %2 : vector<8x256xf32>
    %c0_3 = arith.constant 0 : index
    %c0_4 = arith.constant 0 : index
    %4 = vector.load %arg4[%c0_3, %c0_4] : memref<8x256xf32, #tpu.memory_space<vmem>>, vector<8x256xf32>
    tpu.vector_store %arg4[%c0_3, %c0_4], %3 {strides = array<i32>} : memref<8x256xf32, #tpu.memory_space<vmem>>, vector<8x256xf32>,
    return
  }
  func.func @transform_0(%arg0: i32, %arg1: i32) -> (i32, i32) {
    %c0_i32 = arith.constant 0 : i32
    return %arg0, %arg1 : i32, i32
  }
  func.func @transform_1(%arg0: i32, %arg1: i32) -> (i32, i32) {
    %c0_i32 = arith.constant 0 : i32
    %c0_i32_0 = arith.constant 0 : i32
    return %arg0, %c0_i32 : i32, i32
  }
  func.func @transform_2(%arg0: i32, %arg1: i32) -> (i32, i32) {
    %c0_i32 = arith.constant 0 : i32
    return %arg0, %arg1 : i32, i32
  }
}

</mosaic_0001>

<llo_original>
// kernel: tpu_custom_call.1
$region0: #{tpu_custom_call.1}
  #allocation0 [shape = 'u32[]', space=smem, size = 0x4, offset = 0x4, fixed_abs, tag = 'smem constant byte address 0x4 - core index']
  #allocation1 [shape = 'u32[72,128]{1,0:T(1,128)}', space=vmem, size = 0x9000, scoped, tag = 'internal scratch']
  %s0 = inlined_call_operand.hbm [shape: f32[8,256], index: 0, kind: input, shape index: {}]
  %s1 = inlined_call_operand.vmem [shape: f32[8,1], index: 1, kind: input, shape index: {}]
  %s2 = inlined_call_operand.hbm [shape: f32[8,256], index: 2, kind: output, shape index: {}]
  %s3 = sld [smem:[#allocation0]]
  $region22: #{tpu_custom_call.1} parent=0
    _
  %s5 = ssub.s32 1, %s3
  %s6 = scalar_select 0, %s5, %s3
  $region1: #{tpu_custom_call.1} parent=0
    #allocation2 [shape = 'u8[8192]{0}', space=vmem, size = 0x2000, scoped, tag = 'input window, operand 0, single buffered']
    #allocation3 [shape = 's32[1]{0}', space=sflag, size = 0x4, scoped, tag = 'scoped memory for tpu_custom_call.1']
    #allocation4 [shape = 's32[1]{0}', space=sflag, size = 0x4, scoped, tag = 'scoped memory for tpu_custom_call.1']
    #allocation5 [shape = 'u8[8192]{0}', space=vmem, size = 0x2000, scoped, tag = 'output window, operand 0, single buffered']
    %7 = vsyncpa [#allocation3], 0
    %8 = vsyncpa [#allocation4], 0
    // Predicated region
    $region2: #{tpu_custom_call.1} parent=1 // pred_check
      _
    $region3: #{tpu_custom_call.1} parent=1 // pred_check_branch
      %10 = sbr.rel (0) target = $region5
    $region4: #{tpu_custom_call.1} parent=1 // pred_region
      %12 = vsyncadd [#allocation3], 0
      %s14 = sshll.u32 %s0, 4
      %s15 = int_to_ptr.hbm [resolvable:$true] %s14
      %s16 = sshll.u32 [#allocation2], 4
      %s17 = int_to_ptr.vmem [resolvable:$true] %s16
      %19 = dma.hbm_to_vmem [thread:$0]  %s15, 256, %s17, [#allocation3]
    $region5: #{tpu_custom_call.1} parent=1 // pred_fallthru
      _
    // Predicated region
    $region6: #{tpu_custom_call.1} parent=1 // pred_check
      _
    $region7: #{tpu_custom_call.1} parent=1 // pred_check_branch
      %21 = sbr.rel (0) target = $region9
    $region8: #{tpu_custom_call.1} parent=1 // pred_region
      _
    $region9: #{tpu_custom_call.1} parent=1 // pred_fallthru
      _
    // Predicated region
    $region10: #{tpu_custom_call.1} parent=1 // pred_check
      _
    $region11: #{tpu_custom_call.1} parent=1 // pred_check_branch
      %23 = sbr.rel (0) target = $region13
    $region12: #{tpu_custom_call.1} parent=1 // pred_region
      %25 = dma.done [#allocation3], 256
    $region13: #{tpu_custom_call.1} parent=1 // pred_fallthru
      _
    %v26 = vld [vmem:[#allocation2] sm:$0xff]
    %v27 = vld [vmem:[#allocation2 + $0x8] sm:$0xff]
    %v28 = vld [vmem:[%s1] sm:$0xff]
    %30 = vset.pattern.permute.xlu0 0
    %31 = vperm.xlu0 %30, %v28
    %v32 = vpop.permute.xlu0 %31
    %v34 = vadd.f32 %v26, %v32
    %v35 = vadd.f32 %v27, %v32
    %36 = vst [vmem:[#allocation5] sm:$0xff] %v34
    %37 = vst [vmem:[#allocation5 + $0x8] sm:$0xff] %v35
    // Predicated region
    $region14: #{tpu_custom_call.1} parent=1 // pred_check
      _
    $region15: #{tpu_custom_call.1} parent=1 // pred_check_branch
      %39 = sbr.rel (0) target = $region17
    $region16: #{tpu_custom_call.1} parent=1 // pred_region
      %41 = vsyncadd [#allocation4], 0
      %s43 = sshll.u32 [#allocation5], 4
      %s44 = int_to_ptr.vmem [resolvable:$true] %s43
      %s45 = sshll.u32 %s2, 4
      %s46 = int_to_ptr.hbm [resolvable:$true] %s45
      %48 = dma.vmem_to_hbm [thread:$0]  %s44, 256, %s46, [#allocation4]
    $region17: #{tpu_custom_call.1} parent=1 // pred_fallthru
      _
    // Predicated region
    $region18: #{tpu_custom_call.1} parent=1 // pred_check
      _
    $region19: #{tpu_custom_call.1} parent=1 // pred_check_branch
      %50 = sbr.rel (0) target = $region21
    $region20: #{tpu_custom_call.1} parent=1 // pred_region
      %52 = dma.done [#allocation4], 256
    $region21: #{tpu_custom_call.1} parent=1 // pred_fallthru
      _
    %53 = vsyncpa [#allocation3], 1
    %54 = vsyncpa [#allocation4], 1

</llo_original>
